<compile_context>
chip_gen: v7x
topology: tpu7x:2x2x1
jax: 0.10.0
libtpu: 0.0.40
codegen_flags: <defaults>
</compile_context>

<pallas_src>
import functools

import jax
import jax.numpy as jnp
from jax.experimental import pallas as pl
from jax.experimental.pallas import tpu as pltpu


def conv_gru_kernel(x_ref, h_ref, wx_ref, wh_ref, bx_ref, bh_ref, out_ref):
    """One (batch b, spatial tile s) block.

    x_ref:   (Cin,  TS)     input channels  x spatial lanes
    h_ref:   (Cout, TS)     hidden channels x spatial lanes
    wx_ref:  (3*Cout, Cin)  fused [W_update_x; W_reset_x; W_input]
    wh_ref:  (3*Cout, Cout) fused [W_update_h; W_reset_h; W_hidden]
    bx_ref:  (3*Cout, 1)    fused [b_update;   b_reset;   b_input]
    bh_ref:  (Cout, 1)      bias of conv_for_hidden (scaled by reset gate)
    out_ref: (Cout, TS)
    """
    x = x_ref[...]
    h = h_ref[...]
    c = out_ref.shape[0]

    # Two fused channel-mixing matmuls; the spatial axis stays lane-dense.
    gx = jnp.dot(wx_ref[...], x, preferred_element_type=jnp.float32) + bx_ref[...]
    gh = jnp.dot(wh_ref[...], h, preferred_element_type=jnp.float32)

    u = jax.nn.sigmoid(gx[:c] + gh[:c])                       # update gate
    r = jax.nn.sigmoid(gx[c:2 * c] + gh[c:2 * c])             # reset gate
    mem = jnp.maximum(gx[2 * c:] + r * (gh[2 * c:] + bh_ref[...]), 0.0)  # ReLU

    # u*h + (1-u)*mem, rewritten to drop one multiply.
    out_ref[...] = mem + u * (h - mem)


def _pick_spatial_tile(hw, batch, max_tile):
    """Largest multiple-of-128 divisor of hw, capped at max_tile (lane-dense)."""
    if hw % 128 != 0:
        return hw  # full extent: allowed since block dim == array dim
    t = min(max_tile, hw)
    t -= t % 128
    while hw % t != 0:
        t -= 128
    # Keep >= 2 grid steps where possible so both v7x TensorCores get work.
    if batch * (hw // t) < 2 and t % 256 == 0:
        t //= 2
    return t


def conv_gru_cell(x, hidden, params, *, max_spatial_tile=2048):
    """x: (B, Cin, H, W) f32 NCHW; hidden: (B, Cout, H, W) f32 NCHW."""
    B, Cin, H, W = x.shape
    Cout = hidden.shape[1]
    HW = H * W
    wx, wh, bx, bh = params

    ts = _pick_spatial_tile(HW, B, max_spatial_tile)

    # Free reshapes (no data movement in NCHW): fold H, W into one lane axis.
    x3 = x.reshape(B, Cin, HW)
    h3 = hidden.reshape(B, Cout, HW)

    def io_spec(c):
        return pl.BlockSpec((None, c, ts), lambda b, s: (b, 0, s))

    def resident_spec(arr):
        # Tiny weight/bias blocks: constant block index -> fetched once, stay
        # resident in VMEM across all grid steps.
        return pl.BlockSpec(arr.shape, lambda b, s: (0,) * arr.ndim)

    out3 = pl.pallas_call(
        conv_gru_kernel,
        out_shape=jax.ShapeDtypeStruct((B, Cout, HW), jnp.float32),
        grid_spec=pltpu.PrefetchScalarGridSpec(
            num_scalar_prefetch=0,
            grid=(B, HW // ts),
            in_specs=[
                io_spec(Cin),                     # x
                io_spec(Cout),                    # hidden
                resident_spec(wx), resident_spec(wh),
                resident_spec(bx), resident_spec(bh),
            ],
            out_specs=io_spec(Cout),
        ),
        # New hidden state may overwrite the old one in place (each hidden
        # block is fully read before its output block is written).  Callers
        # that donate the recurrent state avoid a separate output allocation.
        input_output_aliases={1: 0},
        compiler_params=pltpu.CompilerParams(
            dimension_semantics=("parallel", "parallel"),
            vmem_limit_bytes=32 * 1024 * 1024,   # explicit budget (v7x-safe)
        ),
    )(x3, h3, wx, wh, bx, bh)

    h_new = out3.reshape(B, Cout, H, W)
    return h_new, h_new


# --------------------------------------------------------------------------
# Parameter construction (PyTorch Conv2d layout) + fusion for the kernel.
# --------------------------------------------------------------------------
def init_params(key, in_channels, out_channels):
    """Per-layer weights in the PyTorch Conv2d layout: (Cout, Cin) / (Cout,)."""
    ks = jax.random.split(key, 8)
    ctot = in_channels + out_channels

    def w(k, cout, cin):
        return jax.random.normal(k, (cout, cin), jnp.float32) * 0.1

    def b(k, cout):
        return jax.random.normal(k, (cout,), jnp.float32) * 0.1

    return dict(
        w_update=w(ks[0], out_channels, ctot), b_update=b(ks[1], out_channels),
        w_reset=w(ks[2], out_channels, ctot), b_reset=b(ks[3], out_channels),
        w_input=w(ks[4], out_channels, in_channels), b_input=b(ks[5], out_channels),
        w_hidden=w(ks[6], out_channels, out_channels), b_hidden=b(ks[7], out_channels),
    )


def fuse_params(raw, in_channels):
    """Stack the four 1x1 convs into the two fused matrices used by the kernel."""
    wx = jnp.concatenate(
        [raw["w_update"][:, :in_channels],
         raw["w_reset"][:, :in_channels],
         raw["w_input"]], axis=0)                                  # (3*Cout, Cin)
    wh = jnp.concatenate(
        [raw["w_update"][:, in_channels:],
         raw["w_reset"][:, in_channels:],
         raw["w_hidden"]], axis=0)                                 # (3*Cout, Cout)
    bx = jnp.concatenate(
        [raw["b_update"], raw["b_reset"], raw["b_input"]], axis=0)[:, None]  # (3*Cout, 1)
    bh = raw["b_hidden"][:, None]                                  # (Cout, 1)
    return wx, wh, bx, bh


# --------------------------------------------------------------------------
# Pure-JAX reference mirroring the PyTorch forward.
# --------------------------------------------------------------------------
def _conv1x1(x, w, b):
    """NCHW 1x1 conv: x (B, Cin, H, W), w (Cout, Cin), b (Cout,)."""
    y = jnp.einsum("bihw,oi->bohw", x, w, precision=jax.lax.Precision.HIGHEST)
    return y + b[None, :, None, None]


def conv_gru_ref(x, hidden, raw):
    inp = jnp.concatenate([x, hidden], axis=1)
    u = jax.nn.sigmoid(_conv1x1(inp, raw["w_update"], raw["b_update"]))
    r = jax.nn.sigmoid(_conv1x1(inp, raw["w_reset"], raw["b_reset"]))
    mem = jax.nn.relu(_conv1x1(x, raw["w_input"], raw["b_input"])
                      + r * _conv1x1(hidden, raw["w_hidden"], raw["b_hidden"]))
    return u * hidden + (1.0 - u) * mem


if __name__ == "__main__":
    in_channels, out_channels = 4, 8
    B, H, W = 2, 16, 16

    key = jax.random.PRNGKey(0)
    kx, kh, kp = jax.random.split(key, 3)
    x = jax.random.normal(kx, (B, in_channels, H, W), jnp.float32)
    hidden = jax.random.normal(kh, (B, out_channels, H, W), jnp.float32)

    raw = init_params(kp, in_channels, out_channels)
    params = fuse_params(raw, in_channels)

    fn = jax.jit(functools.partial(conv_gru_cell, params=params))
    h_new, h_out = fn(x, hidden)
    jax.block_until_ready(h_new)

    ref = conv_gru_ref(x, hidden, raw)
    assert h_new.shape == (B, out_channels, H, W)
    assert jnp.allclose(h_new, ref, atol=2e-5, rtol=1e-5), \
        float(jnp.abs(h_new - ref).max())
    assert jnp.array_equal(h_new, h_out)

    print("KERNEL_OK")
</pallas_src>

<mosaic_0001>
module attributes {stable_mosaic.version = 11 : i64} {
  func.func @conv_gru_kernel(%arg0: i32, %arg1: i32, %arg2: memref<1x4x256xf32, #tpu.memory_space<vmem>>, %arg3: memref<1x8x256xf32, #tpu.memory_space<vmem>>, %arg4: memref<24x4xf32, #tpu.memory_space<vmem>>, %arg5: memref<24x8xf32, #tpu.memory_space<vmem>>, %arg6: memref<24x1xf32, #tpu.memory_space<vmem>>, %arg7: memref<8x1xf32, #tpu.memory_space<vmem>>, %arg8: memref<1x8x256xf32, #tpu.memory_space<vmem>>) attributes {dimension_semantics = [#tpu.dimension_semantics<parallel>, #tpu.dimension_semantics<parallel>], iteration_bounds = array<i64: 2, 1>, scalar_prefetch = 0 : i64, scratch_operands = 0 : i64, tpu.core_type = #tpu.core_type<tc>, window_params = [{transform_indices = @transform_0, window_bounds = array<i64: 1, 4, 256>}, {transform_indices = @transform_1, window_bounds = array<i64: 1, 8, 256>}, {pipeline_mode = #tpu.pipeline_mode<synchronous>, transform_indices = @transform_2, window_bounds = array<i64: 24, 4>}, {pipeline_mode = #tpu.pipeline_mode<synchronous>, transform_indices = @transform_3, window_bounds = array<i64: 24, 8>}, {pipeline_mode = #tpu.pipeline_mode<synchronous>, transform_indices = @transform_4, window_bounds = array<i64: 24, 1>}, {pipeline_mode = #tpu.pipeline_mode<synchronous>, transform_indices = @transform_5, window_bounds = array<i64: 8, 1>}, {transform_indices = @transform_6, window_bounds = array<i64: 1, 8, 256>}]} {
    %c0 = arith.constant 0 : index
    %c0_0 = arith.constant 0 : index
    %c0_1 = arith.constant 0 : index
    %0 = vector.load %arg2[%c0, %c0_0, %c0_1] : memref<1x4x256xf32, #tpu.memory_space<vmem>>, vector<1x4x256xf32>
    %1 = vector.shape_cast %0 : vector<1x4x256xf32> to vector<4x256xf32>
    %c0_2 = arith.constant 0 : index
    %c0_3 = arith.constant 0 : index
    %c0_4 = arith.constant 0 : index
    %2 = vector.load %arg3[%c0_2, %c0_3, %c0_4] : memref<1x8x256xf32, #tpu.memory_space<vmem>>, vector<1x8x256xf32>
    %3 = vector.shape_cast %2 : vector<1x8x256xf32> to vector<8x256xf32>
    %c0_5 = arith.constant 0 : index
    %c0_6 = arith.constant 0 : index
    %4 = vector.load %arg4[%c0_5, %c0_6] : memref<24x4xf32, #tpu.memory_space<vmem>>, vector<24x4xf32>
    %cst = arith.constant dense<0.000000e+00> : vector<24x256xf32>
    %5 = tpu.matmul %4, %1, %cst {dimension_numbers = #tpu.dot_dimension_numbers<[1], [0], [0], [1], [0, 0, 1, 1], [], []>} : vector<24x4xf32>, vector<4x256xf32>, vector<24x256xf32> -> vector<24x256xf32>
    %c0_7 = arith.constant 0 : index
    %c0_8 = arith.constant 0 : index
    %6 = vector.load %arg6[%c0_7, %c0_8] : memref<24x1xf32, #tpu.memory_space<vmem>>, vector<24x1xf32>
    %7 = vector.broadcast %6 : vector<24x1xf32> to vector<24x256xf32>
    %8 = arith.addf %5, %7 : vector<24x256xf32>
    %c0_9 = arith.constant 0 : index
    %c0_10 = arith.constant 0 : index
    %9 = vector.load %arg5[%c0_9, %c0_10] : memref<24x8xf32, #tpu.memory_space<vmem>>, vector<24x8xf32>
    %cst_11 = arith.constant dense<0.000000e+00> : vector<24x256xf32>
    %10 = tpu.matmul %9, %3, %cst_11 {dimension_numbers = #tpu.dot_dimension_numbers<[1], [0], [0], [1], [0, 0, 1, 1], [], []>} : vector<24x8xf32>, vector<8x256xf32>, vector<24x256xf32> -> vector<24x256xf32>
    %11 = vector.extract_strided_slice %8 {offsets = [0, 0], sizes = [8, 256], strides = [1, 1]} : vector<24x256xf32> to vector<8x256xf32>
    %12 = vector.extract_strided_slice %10 {offsets = [0, 0], sizes = [8, 256], strides = [1, 1]} : vector<24x256xf32> to vector<8x256xf32>
    %13 = arith.addf %11, %12 : vector<8x256xf32>
    %14 = arith.negf %13 : vector<8x256xf32>
    %15 = math.exp %14 : vector<8x256xf32>
    %cst_12 = arith.constant 1.000000e+00 : f32
    %16 = vector.broadcast %cst_12 : f32 to vector<8x256xf32>
    %17 = arith.addf %16, %15 : vector<8x256xf32>
    %18 = arith.divf %16, %17 : vector<8x256xf32>
    %19 = vector.extract_strided_slice %8 {offsets = [8, 0], sizes = [8, 256], strides = [1, 1]} : vector<24x256xf32> to vector<8x256xf32>
    %20 = vector.extract_strided_slice %10 {offsets = [8, 0], sizes = [8, 256], strides = [1, 1]} : vector<24x256xf32> to vector<8x256xf32>
    %21 = arith.addf %19, %20 : vector<8x256xf32>
    %22 = arith.negf %21 : vector<8x256xf32>
    %23 = math.exp %22 : vector<8x256xf32>
    %cst_13 = arith.constant 1.000000e+00 : f32
    %24 = vector.broadcast %cst_13 : f32 to vector<8x256xf32>
    %25 = arith.addf %24, %23 : vector<8x256xf32>
    %26 = arith.divf %24, %25 : vector<8x256xf32>
    %27 = vector.extract_strided_slice %8 {offsets = [16, 0], sizes = [8, 256], strides = [1, 1]} : vector<24x256xf32> to vector<8x256xf32>
    %28 = vector.extract_strided_slice %10 {offsets = [16, 0], sizes = [8, 256], strides = [1, 1]} : vector<24x256xf32> to vector<8x256xf32>
    %c0_14 = arith.constant 0 : index
    %c0_15 = arith.constant 0 : index
    %29 = vector.load %arg7[%c0_14, %c0_15] : memref<8x1xf32, #tpu.memory_space<vmem>>, vector<8x1xf32>
    %30 = vector.broadcast %29 : vector<8x1xf32> to vector<8x256xf32>
    %31 = arith.addf %28, %30 : vector<8x256xf32>
    %32 = arith.mulf %26, %31 : vector<8x256xf32>
    %33 = arith.addf %27, %32 : vector<8x256xf32>
    %cst_16 = arith.constant 0.000000e+00 : f32
    %34 = vector.broadcast %cst_16 : f32 to vector<8x256xf32>
    %35 = arith.maximumf %33, %34 : vector<8x256xf32>
    %36 = arith.subf %3, %35 : vector<8x256xf32>
    %37 = arith.mulf %18, %36 : vector<8x256xf32>
    %38 = arith.addf %35, %37 : vector<8x256xf32>
    %c0_17 = arith.constant 0 : index
    %c0_18 = arith.constant 0 : index
    %c0_19 = arith.constant 0 : index
    %39 = vector.load %arg8[%c0_17, %c0_18, %c0_19] : memref<1x8x256xf32, #tpu.memory_space<vmem>>, vector<1x8x256xf32>
    %40 = vector.shape_cast %39 : vector<1x8x256xf32> to vector<8x256xf32>
    %41 = vector.shape_cast %38 : vector<8x256xf32> to vector<1x8x256xf32>
    tpu.vector_store %arg8[%c0_17, %c0_18, %c0_19], %41 {strides = array<i32>} : memref<1x8x256xf32, #tpu.memory_space<vmem>>, vector<1x8x256xf32>,
    return
  }
  func.func @transform_0(%arg0: i32, %arg1: i32) -> (i32, i32, i32) {
    %c0_i32 = arith.constant 0 : i32
    %c0_i32_0 = arith.constant 0 : i32
    return %arg0, %c0_i32, %arg1 : i32, i32, i32
  }
  func.func @transform_1(%arg0: i32, %arg1: i32) -> (i32, i32, i32) {
    %c0_i32 = arith.constant 0 : i32
    %c0_i32_0 = arith.constant 0 : i32
    return %arg0, %c0_i32, %arg1 : i32, i32, i32
  }
  func.func @transform_2(%arg0: i32, %arg1: i32) -> (i32, i32) {
    %c0_i32 = arith.constant 0 : i32
    %c0_i32_0 = arith.constant 0 : i32
    %c0_i32_1 = arith.constant 0 : i32
    return %c0_i32, %c0_i32_0 : i32, i32
  }
  func.func @transform_3(%arg0: i32, %arg1: i32) -> (i32, i32) {
    %c0_i32 = arith.constant 0 : i32
    %c0_i32_0 = arith.constant 0 : i32
    %c0_i32_1 = arith.constant 0 : i32
    return %c0_i32, %c0_i32_0 : i32, i32
  }
  func.func @transform_4(%arg0: i32, %arg1: i32) -> (i32, i32) {
    %c0_i32 = arith.constant 0 : i32
    %c0_i32_0 = arith.constant 0 : i32
    %c0_i32_1 = arith.constant 0 : i32
    return %c0_i32, %c0_i32_0 : i32, i32
  }
  func.func @transform_5(%arg0: i32, %arg1: i32) -> (i32, i32) {
    %c0_i32 = arith.constant 0 : i32
    %c0_i32_0 = arith.constant 0 : i32
    %c0_i32_1 = arith.constant 0 : i32
    return %c0_i32, %c0_i32_0 : i32, i32
  }
  func.func @transform_6(%arg0: i32, %arg1: i32) -> (i32, i32, i32) {
    %c0_i32 = arith.constant 0 : i32
    %c0_i32_0 = arith.constant 0 : i32
    return %arg0, %c0_i32, %arg1 : i32, i32, i32
  }
}

</mosaic_0001>

<llo_original>
// kernel: conv_gru_cell.1
$region0: #{conv_gru_cell.1}
  #allocation0 [shape = 'u32[]', space=smem, size = 0x4, offset = 0x4, fixed_abs, tag = 'smem constant byte address 0x4 - core index']
  #allocation1 [shape = 'u32[144,128]{1,0:T(1,128)}', space=vmem, size = 0x12000, scoped, tag = 'internal scratch']
  %s0 = inlined_call_operand.vmem [shape: f32[2,4,256], index: 0, kind: input, shape index: {}]
  %s1 = inlined_call_operand.vmem [shape: f32[2,8,256], index: 1, kind: input, shape index: {}, may-alias: {1,6}]
  %s2 = inlined_call_operand.vmem [shape: f32[24,4], index: 2, kind: input, shape index: {}]
  %s3 = inlined_call_operand.vmem [shape: f32[24,8], index: 3, kind: input, shape index: {}]
  %s4 = inlined_call_operand.vmem [shape: f32[24,1], index: 4, kind: input, shape index: {}]
  %s5 = inlined_call_operand.vmem [shape: f32[8,1], index: 5, kind: input, shape index: {}]
  %s6 = inlined_call_operand.vmem [shape: f32[2,8,256], index: 6, kind: output, shape index: {}, may-alias: {1,6}]
  %s7 = sld [smem:[#allocation0]]
  $region57: #{conv_gru_cell.1} parent=0
    _
  %s9 = ssub.s32 1, %s7
  %s10 = scalar_select 0, %s9, %s7
  loop: start=0, step=1, limit=4
  $region2: #{conv_gru_cell.1} parent=0 // loop_pre_header
    _
  $region3: #{conv_gru_cell.1} parent=0 // loop_header
    %s12 = sphi 0, %s16
    %p13 = scmp.ge.s32.totalorder %s12, 4
    %s19 = sphi 0, %s31
    %s20 = sphi 0, %s27
    %s21 = sphi 0, %s19
    %s22 = sphi 0, %s20
    %s23 = sphi 0, %s21
    %s24 = sphi 0, %s22
    %s36 = sphi 0, %s38
    %s39 = sphi 0, %s36
    %s40 = sphi 0, %s39
    %s56 = sphi 0, %s40
    %s64 = sphi 0, %s66
    %s67 = sphi 0, %s64
    %s68 = sphi 0, %s67
    %s84 = sphi 0, %s68
    %s88 = sphi 0, %s88
    %s90 = sphi 0, %s88
    %s91 = sphi 0, %s90
    %s105 = sphi 0, %s91
    %s109 = sphi 0, %s109
    %s111 = sphi 0, %s109
    %s112 = sphi 0, %s111
    %s126 = sphi 0, %s112
    %s130 = sphi 0, %s130
    %s132 = sphi 0, %s130
    %s133 = sphi 0, %s132
    %s147 = sphi 0, %s133
    %s151 = sphi 0, %s151
    %s153 = sphi 0, %s151
    %s154 = sphi 0, %s153
    %s168 = sphi 0, %s154
    %s176 = sphi 0, %s178
    %s179 = sphi 0, %s176
    %s180 = sphi 0, %s179
    %s196 = sphi 0, %s180
  $region4: #{conv_gru_cell.1} parent=0 // loop_header_branch
    %15 = sbr.rel (%p13) target = $region8
  $region5: #{conv_gru_cell.1} parent=0 // loop_body
    %s17 = ssub.s32 %s12, 1
    %s18 = ssub.s32 %s12, 2
    %s25 = sadd.s32 1, %s20
    %p26 = scmp.ge.s32.totalorder %s25, 1
    %s27 = scalar_select %p26, 0, %s25
    %s28 = sadd.s32 1, %s19
    %s29 = scalar_select %p26, %s28, %s19
    %p30 = scmp.ge.s32.totalorder %s29, 2
    %s31 = scalar_select %p30, 0, %s29
    %s32 = ssub.s32 %s19, %s31
    %s33 = ssub.s32 %s20, %s27
    %s34 = sor.u32 %s32, %s33
    %p35 = scmp.eq.s32.totalorder %s34, 0
    %s37 = sadd.s32 %s36, 1
    %s38 = scalar_select %p35, %s36, %s37
    %p41 = pneg %p35
    %p42 = scmp.eq.s32.totalorder %s12, 1
    %p43 = por %p41, %p42
    %p44 = scmp.ne.s32.totalorder %s36, %s39
    %p45 = scmp.eq.s32.totalorder %s12, 0
    %p46 = por %p44, %p45
    %p47 = scmp.ne.s32.totalorder %s36, %s39
    %p48 = scmp.eq.s32.totalorder %s17, 1
    %p49 = por %p47, %p48
    %p50 = scmp.ne.s32.totalorder %s39, %s40
    %p51 = scmp.eq.s32.totalorder %s17, 0
    %p52 = por %p50, %p51
    %p53 = scmp.ne.s32.totalorder %s39, %s40
    %p54 = scmp.eq.s32.totalorder %s18, 1
    %p55 = por %p53, %p54
    %p57 = scmp.ne.s32.totalorder %s40, %s56
    %p58 = scmp.eq.s32.totalorder %s18, 0
    %p59 = por %p57, %p58
    %s60 = ssub.s32 %s19, %s31
    %s61 = ssub.s32 %s20, %s27
    %s62 = sor.u32 %s60, %s61
    %p63 = scmp.eq.s32.totalorder %s62, 0
    %s65 = sadd.s32 %s64, 1
    %s66 = scalar_select %p63, %s64, %s65
    %p69 = pneg %p63
    %p70 = scmp.eq.s32.totalorder %s12, 1
    %p71 = por %p69, %p70
    %p72 = scmp.ne.s32.totalorder %s64, %s67
    %p73 = scmp.eq.s32.totalorder %s12, 0
    %p74 = por %p72, %p73
    %p75 = scmp.ne.s32.totalorder %s64, %s67
    %p76 = scmp.eq.s32.totalorder %s17, 1
    %p77 = por %p75, %p76
    %p78 = scmp.ne.s32.totalorder %s67, %s68
    %p79 = scmp.eq.s32.totalorder %s17, 0
    %p80 = por %p78, %p79
    %p81 = scmp.ne.s32.totalorder %s67, %s68
    %p82 = scmp.eq.s32.totalorder %s18, 1
    %p83 = por %p81, %p82
    %p85 = scmp.ne.s32.totalorder %s68, %s84
    %p86 = scmp.eq.s32.totalorder %s18, 0
    %p87 = por %p85, %p86
    %s89 = sadd.s32 %s88, 1
    %p92 = scmp.eq.s32.totalorder %s12, 1
    %p93 = scmp.ne.s32.totalorder %s88, %s90
    %p94 = scmp.eq.s32.totalorder %s12, 0
    %p95 = por %p93, %p94
    %p96 = scmp.ne.s32.totalorder %s88, %s90
    %p97 = scmp.eq.s32.totalorder %s17, 1
    %p98 = por %p96, %p97
    %p99 = scmp.ne.s32.totalorder %s90, %s91
    %p100 = scmp.eq.s32.totalorder %s17, 0
    %p101 = por %p99, %p100
    %p102 = scmp.ne.s32.totalorder %s90, %s91
    %p103 = scmp.eq.s32.totalorder %s18, 1
    %p104 = por %p102, %p103
    %p106 = scmp.ne.s32.totalorder %s91, %s105
    %p107 = scmp.eq.s32.totalorder %s18, 0
    %p108 = por %p106, %p107
    %s110 = sadd.s32 %s109, 1
    %p113 = scmp.eq.s32.totalorder %s12, 1
    %p114 = scmp.ne.s32.totalorder %s109, %s111
    %p115 = scmp.eq.s32.totalorder %s12, 0
    %p116 = por %p114, %p115
    %p117 = scmp.ne.s32.totalorder %s109, %s111
    %p118 = scmp.eq.s32.totalorder %s17, 1
    %p119 = por %p117, %p118
    %p120 = scmp.ne.s32.totalorder %s111, %s112
    %p121 = scmp.eq.s32.totalorder %s17, 0
    %p122 = por %p120, %p121
    %p123 = scmp.ne.s32.totalorder %s111, %s112
    %p124 = scmp.eq.s32.totalorder %s18, 1
    %p125 = por %p123, %p124
    %p127 = scmp.ne.s32.totalorder %s112, %s126
    %p128 = scmp.eq.s32.totalorder %s18, 0
    %p129 = por %p127, %p128
    %s131 = sadd.s32 %s130, 1
    %p134 = scmp.eq.s32.totalorder %s12, 1
    %p135 = scmp.ne.s32.totalorder %s130, %s132
    %p136 = scmp.eq.s32.totalorder %s12, 0
    %p137 = por %p135, %p136
    %p138 = scmp.ne.s32.totalorder %s130, %s132
    %p139 = scmp.eq.s32.totalorder %s17, 1
    %p140 = por %p138, %p139
    %p141 = scmp.ne.s32.totalorder %s132, %s133
    %p142 = scmp.eq.s32.totalorder %s17, 0
    %p143 = por %p141, %p142
    %p144 = scmp.ne.s32.totalorder %s132, %s133
    %p145 = scmp.eq.s32.totalorder %s18, 1
    %p146 = por %p144, %p145
    %p148 = scmp.ne.s32.totalorder %s133, %s147
    %p149 = scmp.eq.s32.totalorder %s18, 0
    %p150 = por %p148, %p149
    %s152 = sadd.s32 %s151, 1
    %p155 = scmp.eq.s32.totalorder %s12, 1
    %p156 = scmp.ne.s32.totalorder %s151, %s153
    %p157 = scmp.eq.s32.totalorder %s12, 0
    %p158 = por %p156, %p157
    %p159 = scmp.ne.s32.totalorder %s151, %s153
    %p160 = scmp.eq.s32.totalorder %s17, 1
    %p161 = por %p159, %p160
    %p162 = scmp.ne.s32.totalorder %s153, %s154
    %p163 = scmp.eq.s32.totalorder %s17, 0
    %p164 = por %p162, %p163
    %p165 = scmp.ne.s32.totalorder %s153, %s154
    %p166 = scmp.eq.s32.totalorder %s18, 1
    %p167 = por %p165, %p166
    %p169 = scmp.ne.s32.totalorder %s154, %s168
    %p170 = scmp.eq.s32.totalorder %s18, 0
    %p171 = por %p169, %p170
    %s172 = ssub.s32 %s19, %s31
    %s173 = ssub.s32 %s20, %s27
    %s174 = sor.u32 %s172, %s173
    %p175 = scmp.eq.s32.totalorder %s174, 0
    %s177 = sadd.s32 %s176, 1
    %s178 = scalar_select %p175, %s176, %s177
    %p181 = pneg %p175
    %p182 = scmp.eq.s32.totalorder %s12, 1
    %p183 = por %p181, %p182
    %p184 = scmp.ne.s32.totalorder %s176, %s179
    %p185 = scmp.eq.s32.totalorder %s12, 0
    %p186 = por %p184, %p185
    %p187 = scmp.ne.s32.totalorder %s176, %s179
    %p188 = scmp.eq.s32.totalorder %s17, 1
    %p189 = por %p187, %p188
    %p190 = scmp.ne.s32.totalorder %s179, %s180
    %p191 = scmp.eq.s32.totalorder %s17, 0
    %p192 = por %p190, %p191
    %p193 = scmp.ne.s32.totalorder %s179, %s180
    %p194 = scmp.eq.s32.totalorder %s18, 1
    %p195 = por %p193, %p194
    %p197 = scmp.ne.s32.totalorder %s180, %s196
    %p198 = scmp.eq.s32.totalorder %s18, 0
    %p199 = por %p197, %p198
    %p200 = scmp.le.s32.totalorder 1, %s12
    %p201 = scmp.lt.s32.totalorder %s12, 3
    %p202 = pnand %p200, %p201
    %p203 = pneg %p202
    // Predicated region
    $region9: #{conv_gru_cell.1} parent=5 // pred_check
      _
    $region10: #{conv_gru_cell.1} parent=5 // pred_check_branch
      %205 = sbr.rel (%p202) target = $region12
    $region11: #{conv_gru_cell.1} parent=5 // pred_region
      %s206 = ssub.s32 %s12, 1
      // Predicated region
      $region13: #{conv_gru_cell.1} parent=11 // pred_check
        %p207 = pneg %p101
      $region14: #{conv_gru_cell.1} parent=11 // pred_check_branch
        %209 = sbr.rel (%p207) target = $region16
      $region15: #{conv_gru_cell.1} parent=11 // pred_region
        _
      $region16: #{conv_gru_cell.1} parent=11 // pred_fallthru
        _
      // Predicated region
      $region17: #{conv_gru_cell.1} parent=11 // pred_check
        %p210 = pneg %p122
      $region18: #{conv_gru_cell.1} parent=11 // pred_check_branch
        %212 = sbr.rel (%p210) target = $region20
      $region19: #{conv_gru_cell.1} parent=11 // pred_region
        _
      $region20: #{conv_gru_cell.1} parent=11 // pred_fallthru
        _
      // Predicated region
      $region21: #{conv_gru_cell.1} parent=11 // pred_check
        %p213 = pneg %p143
      $region22: #{conv_gru_cell.1} parent=11 // pred_check_branch
        %215 = sbr.rel (%p213) target = $region24
      $region23: #{conv_gru_cell.1} parent=11 // pred_region
        _
      $region24: #{conv_gru_cell.1} parent=11 // pred_fallthru
        _
      // Predicated region
      $region25: #{conv_gru_cell.1} parent=11 // pred_check
        %p216 = pneg %p164
      $region26: #{conv_gru_cell.1} parent=11 // pred_check_branch
        %218 = sbr.rel (%p216) target = $region28
      $region27: #{conv_gru_cell.1} parent=11 // pred_region
        _
      $region28: #{conv_gru_cell.1} parent=11 // pred_fallthru
        _
    $region12: #{conv_gru_cell.1} parent=5 // pred_fallthru
      _
    %p219 = scmp.lt.s32.totalorder %s12, 2
    // Predicated region
    $region29: #{conv_gru_cell.1} parent=5 // pred_check
      %p220 = pneg %p219
    $region30: #{conv_gru_cell.1} parent=5 // pred_check_branch
      %222 = sbr.rel (%p220) target = $region32
    $region31: #{conv_gru_cell.1} parent=5 // pred_region
      // Predicated region
      $region33: #{conv_gru_cell.1} parent=31 // pred_check
        %p223 = pneg %p46
      $region34: #{conv_gru_cell.1} parent=31 // pred_check_branch
        %225 = sbr.rel (%p223) target = $region36
      $region35: #{conv_gru_cell.1} parent=31 // pred_region
        %s226 = smul.u32 2, %s20
        %p227 = scmp.lt.s32.totalorder %s19, 1
        %s228 = scalar_select %p227, %s19, 1
        %p229 = scmp.lt.s32.totalorder %s226, 1
        %s230 = scalar_select %p229, %s226, 1
        %s231 = smul.addr %s228, 2
        %s232 = sadd.s32 %s230, %s231
        %s233 = smul.addr %s232, 4
        %s234 = scalar_lea.vmem %s0, %s233
        %s235 = smul.u32 2, %s20
      $region36: #{conv_gru_cell.1} parent=31 // pred_fallthru
        _
      // Predicated region
      $region37: #{conv_gru_cell.1} parent=31 // pred_check
        %p236 = pneg %p74
      $region38: #{conv_gru_cell.1} parent=31 // pred_check_branch
        %238 = sbr.rel (%p236) target = $region40
      $region39: #{conv_gru_cell.1} parent=31 // pred_region
        %s239 = smul.u32 2, %s20
        %p240 = scmp.lt.s32.totalorder %s19, 1
        %s241 = scalar_select %p240, %s19, 1
        %p242 = scmp.lt.s32.totalorder %s239, 1
        %s243 = scalar_select %p242, %s239, 1
        %s244 = smul.addr %s241, 2
        %s245 = sadd.s32 %s243, %s244
        %s246 = smul.addr %s245, 8
        %s247 = scalar_lea.vmem %s1, %s246
        %s248 = smul.u32 2, %s20
      $region40: #{conv_gru_cell.1} parent=31 // pred_fallthru
        _
    $region32: #{conv_gru_cell.1} parent=5 // pred_fallthru
      _
    %p249 = scmp.le.s32.totalorder 1, %s12
    %p250 = scmp.lt.s32.totalorder %s12, 3
    %p251 = pnand %p249, %p250
    %p252 = pneg %p251
    // Predicated region
    $region41: #{conv_gru_cell.1} parent=5 // pred_check
      _
    $region42: #{conv_gru_cell.1} parent=5 // pred_check_branch
      %254 = sbr.rel (%p251) target = $region44
    $region43: #{conv_gru_cell.1} parent=5 // pred_region
      %s255 = ssub.s32 %s12, 1
      %s256 = smul.u32 2, %s22
      %p257 = scmp.lt.s32.totalorder %s21, 1
      %s258 = scalar_select %p257, %s21, 1
      %p259 = scmp.lt.s32.totalorder %s256, 1
      %s260 = scalar_select %p259, %s256, 1
      %s261 = smul.addr %s258, 2
      %s262 = sadd.s32 %s260, %s261
      %s263 = smul.addr %s262, 4
      %s264 = scalar_lea.vmem %s0, %s263
      %p265 = pneg %p52
      %p266 = pneg %p49
      %s267 = smul.u32 2, %s22
      %p268 = scmp.lt.s32.totalorder %s21, 1
      %s269 = scalar_select %p268, %s21, 1
      %p270 = scmp.lt.s32.totalorder %s267, 1
      %s271 = scalar_select %p270, %s267, 1
      %s272 = smul.addr %s269, 2
      %s273 = sadd.s32 %s271, %s272
      %s274 = smul.addr %s273, 8
      %s275 = scalar_lea.vmem %s1, %s274
      %p276 = pneg %p80
      %p277 = pneg %p77
      %p278 = pneg %p101
      %p279 = pneg %p98
      %p280 = pneg %p122
      %p281 = pneg %p119
      %p282 = pneg %p143
      %p283 = pneg %p140
      %p284 = pneg %p164
      %p285 = pneg %p161
      %p286 = pneg %p192
      %p287 = pneg %p189
      %s288 = smul.u32 2, %s22
      %p289 = scmp.lt.s32.totalorder %s21, 1
      %s290 = scalar_select %p289, %s21, 1
      %p291 = scmp.lt.s32.totalorder %s288, 1
      %s292 = scalar_select %p291, %s288, 1
      %s293 = smul.addr %s290, 2
      %s294 = sadd.s32 %s292, %s293
      %s295 = smul.addr %s294, 8
      %s296 = scalar_lea.vmem %s6, %s295
      %s297 = smul.u32 2, %s22
      %p298 = scmp.lt.s32.totalorder %s21, 1
      %s299 = scalar_select %p298, %s21, 1
      %p300 = scmp.lt.s32.totalorder %s297, 1
      %s301 = scalar_select %p300, %s297, 1
      %s302 = smul.addr %s299, 2
      %s303 = sadd.s32 %s301, %s302
      %s304 = smul.addr %s303, 4
      %s305 = scalar_lea.vmem %s0, %s304
      %s306 = smul.u32 2, %s22
      %s307 = smul.u32 2, %s22
      %p308 = scmp.lt.s32.totalorder %s21, 1
      %s309 = scalar_select %p308, %s21, 1
      %p310 = scmp.lt.s32.totalorder %s307, 1
      %s311 = scalar_select %p310, %s307, 1
      %s312 = smul.addr %s309, 2
      %s313 = sadd.s32 %s311, %s312
      %s314 = smul.addr %s313, 8
      %s315 = scalar_lea.vmem %s1, %s314
      %s316 = smul.u32 2, %s22
      %s317 = smul.u32 2, %s22
      %p318 = scmp.lt.s32.totalorder %s21, 1
      %s319 = scalar_select %p318, %s21, 1
      %p320 = scmp.lt.s32.totalorder %s317, 1
      %s321 = scalar_select %p320, %s317, 1
      %s322 = smul.addr %s319, 2
      %s323 = sadd.s32 %s321, %s322
      %s324 = smul.addr %s323, 8
      %s325 = scalar_lea.vmem %s6, %s324
      %s326 = smul.u32 2, %s22
      %v327 = vld [vmem:[%s305] sm:$0xff]
      %v328 = vld [vmem:[%s315] sm:$0xff]
      %v329 = vld [vmem:[%s315 + $0x8] sm:$0xff]
      %v330 = vld [vmem:[%s2] sm:$0xff]
      %v331 = vld [vmem:[%s2 + $0x8] sm:$0xff]
      %v332 = vld [vmem:[%s2 + $0x10] sm:$0xff]
      %v333 = vld [vmem:[%s4] sm:$0xff]
      %v334 = vld [vmem:[%s4 + $0x8] sm:$0xff]
      %v335 = vld [vmem:[%s4 + $0x10] sm:$0xff]
      %337 = vset.pattern.permute.xlu0 0
      %338 = vperm.xlu0 %337, %v333
      %v339 = vpop.permute.xlu0 %338
      %342 = vset.pattern.permute.xlu0 0
      %343 = vperm.xlu0 %342, %v334
      %v344 = vpop.permute.xlu0 %343
      %347 = vset.pattern.permute.xlu0 0
      %348 = vperm.xlu0 %347, %v335
      %v349 = vpop.permute.xlu0 %348
      %v352 = vcombine.high %v327, %v327
      %vm353 = vcmask 31744
      %v355 = vsel %vm353, %v330, 0
      %v358 = vsel %vm353, %v331, 0
      %v361 = vsel %vm353, %v332, 0
      %vm363 = vcmask 1043456
      %v364 = vsel %vm363, %v327, 0
      %v366 = vsel %vm363, %v352, 0
      %368 = vmatprep.subr.mxu0 %v366
      %369 = vmatpush1.msra.mxu0 %v364
      %370 = vmatprep.subr.mxu0 0.0
      %371 = vmatpush1.msra.mxu0 0.0
      %372 = vmatprep.subr.mxu0 0.0
      %373 = vmatpush1.msra.mxu0 0.0
      %374 = vmatprep.subr.mxu0 0.0
      %375 = vmatpush1.msra.mxu0 0.0
      %376 = vmatprep.subr.mxu0 0.0
      %377 = vmatpush1.msra.mxu0 0.0
      %378 = vmatprep.subr.mxu0 0.0
      %379 = vmatpush1.msra.mxu0 0.0
      %380 = vmatprep.subr.mxu0 0.0
      %381 = vmatpush1.msra.mxu0 0.0
      %382 = vmatprep.subr.mxu0 0.0
      %383 = vmatpush1.msra.mxu0 0.0
      %384 = vmatprep.subr.mxu0 0.0
      %385 = vmatpush1.msra.mxu0 0.0
      %386 = vmatprep.subr.mxu0 0.0
      %387 = vmatpush1.msra.mxu0 0.0
      %388 = vmatprep.subr.mxu0 0.0
      %389 = vmatpush1.msra.mxu0 0.0
      %390 = vmatprep.subr.mxu0 0.0
      %391 = vmatpush1.msra.mxu0 0.0
      %392 = vmatprep.subr.mxu0 0.0
      %393 = vmatpush1.msra.mxu0 0.0
      %394 = vmatprep.subr.mxu0 0.0
      %395 = vmatpush1.msra.mxu0 0.0
      %396 = vmatprep.subr.mxu0 0.0
      %397 = vmatpush1.msra.mxu0 0.0
      %398 = vmatprep.subr.mxu0 0.0
      %399 = vmatpush1.msra.mxu0 0.0
      %400 = vmatprep.subr.mxu0 0.0
      %401 = vmatpush1.msra.mxu0 0.0
      %402 = vmatprep.subr.mxu0 0.0
      %403 = vmatpush1.msra.mxu0 0.0
      %404 = vmatprep.subr.mxu0 0.0
      %405 = vmatpush1.msra.mxu0 0.0
      %406 = vmatprep.subr.mxu0 0.0
      %407 = vmatpush1.msra.mxu0 0.0
      %408 = vmatprep.subr.mxu0 0.0
      %409 = vmatpush1.msra.mxu0 0.0
      %410 = vmatprep.subr.mxu0 0.0
      %411 = vmatpush1.msra.mxu0 0.0
      %412 = vmatprep.subr.mxu0 0.0
      %413 = vmatpush1.msra.mxu0 0.0
      %414 = vmatprep.subr.mxu0 0.0
      %415 = vmatpush1.msra.mxu0 0.0
      %416 = vmatprep.subr.mxu0 0.0
      %417 = vmatpush1.msra.mxu0 0.0
      %418 = vmatprep.subr.mxu0 0.0
      %419 = vmatpush1.msra.mxu0 0.0
      %420 = vmatprep.subr.mxu0 0.0
      %421 = vmatpush1.msra.mxu0 0.0
      %422 = vmatprep.subr.mxu0 0.0
      %423 = vmatpush1.msra.mxu0 0.0
      %424 = vmatprep.subr.mxu0 0.0
      %425 = vmatpush1.msra.mxu0 0.0
      %426 = vmatprep.subr.mxu0 0.0
      %427 = vmatpush1.msra.mxu0 0.0
      %428 = vmatprep.subr.mxu0 0.0
      %429 = vmatpush1.msra.mxu0 0.0
      %430 = vmatprep.subr.mxu0 0.0
      %431 = vmatpush1.msra.mxu0 0.0
      %432 = vmatprep.mubr.f32.mxu0 0.0
      %433 = vmatmul.mubr.f32.gmra.mrb[0].mxu0 %v355
      %v434 = vpop.f32.mrb[0].mxu0
      %v435 = vadd.f32 %v339, %v434
      %v436 = vpop.f32.mrb[0].mxu0
      %v437 = vadd.f32 %v339, %v436
      %438 = vmatprep.mubr.f32.mxu0 0.0
      %439 = vmatmul.mubr.f32.gmra.mrb[0].mxu0 %v358
      %v440 = vpop.f32.mrb[0].mxu0
      %v441 = vadd.f32 %v344, %v440
      %v442 = vpop.f32.mrb[0].mxu0
      %v443 = vadd.f32 %v344, %v442
      %444 = vmatprep.mubr.f32.mxu0 0.0
      %445 = vmatmul.mubr.f32.gmra.mrb[0].mxu0 %v361
      %v446 = vpop.f32.mrb[0].mxu0
      %v447 = vadd.f32 %v349, %v446
      %v448 = vpop.f32.mrb[0].mxu0
      %v449 = vadd.f32 %v349, %v448
      %450 = vdwg.mxu0
      %v451 = vld [vmem:[%s3] sm:$0xff]
      %v452 = vld [vmem:[%s3 + $0x8] sm:$0xff]
      %v453 = vld [vmem:[%s3 + $0x10] sm:$0xff]
      %vm454 = vcmask 64512
      %v456 = vsel %vm454, %v451, 0
      %v459 = vsel %vm454, %v452, 0
      %v462 = vsel %vm454, %v453, 0
      %464 = vmatprep.subr.mxu0 %v329
      %465 = vmatpush1.msra.mxu0 %v328
      %466 = vmatprep.subr.mxu0 0.0
      %467 = vmatpush1.msra.mxu0 0.0
      %468 = vmatprep.subr.mxu0 0.0
      %469 = vmatpush1.msra.mxu0 0.0
      %470 = vmatprep.subr.mxu0 0.0
      %471 = vmatpush1.msra.mxu0 0.0
      %472 = vmatprep.subr.mxu0 0.0
      %473 = vmatpush1.msra.mxu0 0.0
      %474 = vmatprep.subr.mxu0 0.0
      %475 = vmatpush1.msra.mxu0 0.0
      %476 = vmatprep.subr.mxu0 0.0
      %477 = vmatpush1.msra.mxu0 0.0
      %478 = vmatprep.subr.mxu0 0.0
      %479 = vmatpush1.msra.mxu0 0.0
      %480 = vmatprep.subr.mxu0 0.0
      %481 = vmatpush1.msra.mxu0 0.0
      %482 = vmatprep.subr.mxu0 0.0
      %483 = vmatpush1.msra.mxu0 0.0
      %484 = vmatprep.subr.mxu0 0.0
      %485 = vmatpush1.msra.mxu0 0.0
      %486 = vmatprep.subr.mxu0 0.0
      %487 = vmatpush1.msra.mxu0 0.0
      %488 = vmatprep.subr.mxu0 0.0
      %489 = vmatpush1.msra.mxu0 0.0
      %490 = vmatprep.subr.mxu0 0.0
      %491 = vmatpush1.msra.mxu0 0.0
      %492 = vmatprep.subr.mxu0 0.0
      %493 = vmatpush1.msra.mxu0 0.0
      %494 = vmatprep.subr.mxu0 0.0
      %495 = vmatpush1.msra.mxu0 0.0
      %496 = vmatprep.subr.mxu0 0.0
      %497 = vmatpush1.msra.mxu0 0.0
      %498 = vmatprep.subr.mxu0 0.0
      %499 = vmatpush1.msra.mxu0 0.0
      %500 = vmatprep.subr.mxu0 0.0
      %501 = vmatpush1.msra.mxu0 0.0
      %502 = vmatprep.subr.mxu0 0.0
      %503 = vmatpush1.msra.mxu0 0.0
      %504 = vmatprep.subr.mxu0 0.0
      %505 = vmatpush1.msra.mxu0 0.0
      %506 = vmatprep.subr.mxu0 0.0
      %507 = vmatpush1.msra.mxu0 0.0
      %508 = vmatprep.subr.mxu0 0.0
      %509 = vmatpush1.msra.mxu0 0.0
      %510 = vmatprep.subr.mxu0 0.0
      %511 = vmatpush1.msra.mxu0 0.0
      %512 = vmatprep.subr.mxu0 0.0
      %513 = vmatpush1.msra.mxu0 0.0
      %514 = vmatprep.subr.mxu0 0.0
      %515 = vmatpush1.msra.mxu0 0.0
      %516 = vmatprep.subr.mxu0 0.0
      %517 = vmatpush1.msra.mxu0 0.0
      %518 = vmatprep.subr.mxu0 0.0
      %519 = vmatpush1.msra.mxu0 0.0
      %520 = vmatprep.subr.mxu0 0.0
      %521 = vmatpush1.msra.mxu0 0.0
      %522 = vmatprep.subr.mxu0 0.0
      %523 = vmatpush1.msra.mxu0 0.0
      %524 = vmatprep.subr.mxu0 0.0
      %525 = vmatpush1.msra.mxu0 0.0
      %526 = vmatprep.subr.mxu0 0.0
      %527 = vmatpush1.msra.mxu0 0.0
      %528 = vmatprep.mubr.f32.mxu0 0.0
      %529 = vmatmul.mubr.f32.gmra.mrb[0].mxu0 %v456
      %v530 = vpop.f32.mrb[0].mxu0
      %v531 = vadd.f32 0.0, %v530
      %v532 = vpop.f32.mrb[0].mxu0
      %v533 = vadd.f32 0.0, %v532
      %534 = vmatprep.mubr.f32.mxu0 0.0
      %535 = vmatmul.mubr.f32.gmra.mrb[0].mxu0 %v459
      %v536 = vpop.f32.mrb[0].mxu0
      %v537 = vadd.f32 0.0, %v536
      %v538 = vpop.f32.mrb[0].mxu0
      %v539 = vadd.f32 0.0, %v538
      %540 = vmatprep.mubr.f32.mxu0 0.0
      %541 = vmatmul.mubr.f32.gmra.mrb[0].mxu0 %v462
      %v542 = vpop.f32.mrb[0].mxu0
      %v543 = vadd.f32 0.0, %v542
      %v544 = vpop.f32.mrb[0].mxu0
      %v545 = vadd.f32 0.0, %v544
      %546 = vdwg.mxu0
      %v547 = vadd.f32 %v435, %v531
      %v548 = vadd.f32 %v437, %v533
      %v549 = vxor.u32 %v547, 2147483648
      %v550 = vxor.u32 %v548, 2147483648
      %v551 = vmul.f32 %v549, 1.442695
      %v552 = vpow.pop %v551
      %v553 = vmul.f32 %v550, 1.442695
      %v554 = vpow.pop %v553
      %v555 = vadd.f32 %v552, 1.0
      %v556 = vadd.f32 %v554, 1.0
      %v557 = vrcp.pop %v555
      %v558 = vmul.f32 1.0, %v557
      %v559 = vrcp.pop %v556
      %v560 = vmul.f32 1.0, %v559
      %v561 = vadd.f32 %v441, %v537
      %v562 = vadd.f32 %v443, %v539
      %v563 = vxor.u32 %v561, 2147483648
      %v564 = vxor.u32 %v562, 2147483648
      %v565 = vmul.f32 %v563, 1.442695
      %v566 = vpow.pop %v565
      %v567 = vmul.f32 %v564, 1.442695
      %v568 = vpow.pop %v567
      %v569 = vadd.f32 %v566, 1.0
      %v570 = vadd.f32 %v568, 1.0
      %v571 = vrcp.pop %v569
      %v572 = vmul.f32 1.0, %v571
      %v573 = vrcp.pop %v570
      %v574 = vmul.f32 1.0, %v573
      %v575 = vld [vmem:[%s5] sm:$0xff]
      %577 = vset.pattern.permute.xlu0 0
      %578 = vperm.xlu0 %577, %v575
      %v579 = vpop.permute.xlu0 %578
      %v581 = vadd.f32 %v543, %v579
      %v582 = vadd.f32 %v545, %v579
      %v583 = vmul.f32 %v572, %v581
      %v584 = vmul.f32 %v574, %v582
      %v585 = vadd.f32 %v447, %v583
      %v586 = vadd.f32 %v449, %v584
      %v587 = vmax.f32 %v585, 0.0
      %v588 = vmax.f32 %v586, 0.0
      %v589 = vsub.f32 %v328, %v587
      %v590 = vsub.f32 %v329, %v588
      %v591 = vmul.f32 %v558, %v589
      %v592 = vmul.f32 %v560, %v590
      %v593 = vadd.f32 %v587, %v591
      %v594 = vadd.f32 %v588, %v592
      %595 = vst [vmem:[%s325] sm:$0xff] %v593
      %596 = vst [vmem:[%s325 + $0x8] sm:$0xff] %v594
      %s597 = smul.u32 2, %s22
      %p598 = scmp.lt.s32.totalorder %s21, 1
      %s599 = scalar_select %p598, %s21, 1
      %p600 = scmp.lt.s32.totalorder %s597, 1
      %s601 = scalar_select %p600, %s597, 1
      %s602 = smul.addr %s599, 2
      %s603 = sadd.s32 %s601, %s602
      %s604 = smul.addr %s603, 8
      %s605 = scalar_lea.vmem %s6, %s604
      // Predicated region
      $region45: #{conv_gru_cell.1} parent=43 // pred_check
        %p606 = pneg %p189
      $region46: #{conv_gru_cell.1} parent=43 // pred_check_branch
        %608 = sbr.rel (%p606) target = $region48
      $region47: #{conv_gru_cell.1} parent=43 // pred_region
        %s609 = smul.u32 2, %s22
      $region48: #{conv_gru_cell.1} parent=43 // pred_fallthru
        _
    $region44: #{conv_gru_cell.1} parent=5 // pred_fallthru
      _
    %p610 = scmp.le.s32.totalorder 2, %s12
    // Predicated region
    $region49: #{conv_gru_cell.1} parent=5 // pred_check
      %p611 = pneg %p610
    $region50: #{conv_gru_cell.1} parent=5 // pred_check_branch
      %613 = sbr.rel (%p611) target = $region52
    $region51: #{conv_gru_cell.1} parent=5 // pred_region
      %s614 = ssub.s32 %s12, 2
      // Predicated region
      $region53: #{conv_gru_cell.1} parent=51 // pred_check
        %p615 = pneg %p195
      $region54: #{conv_gru_cell.1} parent=51 // pred_check_branch
        %617 = sbr.rel (%p615) target = $region56
      $region55: #{conv_gru_cell.1} parent=51 // pred_region
        %s618 = smul.u32 2, %s24
        %p619 = scmp.lt.s32.totalorder %s23, 1
        %s620 = scalar_select %p619, %s23, 1
        %p621 = scmp.lt.s32.totalorder %s618, 1
        %s622 = scalar_select %p621, %s618, 1
        %s623 = smul.addr %s620, 2
        %s624 = sadd.s32 %s622, %s623
        %s625 = smul.addr %s624, 8
        %s626 = scalar_lea.vmem %s6, %s625
      $region56: #{conv_gru_cell.1} parent=51 // pred_fallthru
        _
    $region52: #{conv_gru_cell.1} parent=5 // pred_fallthru
      _
  $region6: #{conv_gru_cell.1} parent=0 // loop_footer
    %s16 = sadd.s32 1, %s12
  $region7: #{conv_gru_cell.1} parent=0 // loop_footer_branch
    %11 = sbr.rel target = $region3
  $region8: #{conv_gru_cell.1} parent=0 // loop_exit
    _

</llo_original>
